<compile_context>
chip_gen: v7x
topology: tpu7x:2x2x1
jax: 0.10.0
libtpu: 0.0.40
codegen_flags: <defaults>
</compile_context>

<pallas_src>
import jax
import jax.numpy as jnp
from jax.experimental import pallas as pl
from jax.experimental.pallas import tpu as pltpu

EPS = 1e-07

_MAX_ROWS = 1024      # 8*1024*128*4 B = 4 MiB per input block, 8 MiB double-buffered
_CORE_SPLITS = 2      # v7x has 2 TensorCores; harmless sequential split on v5e/v6e


def _iou_dots_kernel(box_ref, o_ref):
    """box_ref: (8, rows, 128) f32, sublanes 0-3 = pr(cx,cy,w,h), 4-7 = gt.

    o_ref: (3, 8, 128) f32 per-core partial sums (resident across the j axis):
      row 0 = sum of squared coord errors over incorrect boxes
      row 1 = count of incorrect boxes
      row 2 = sum of IoU over correct boxes
    """
    j = pl.program_id(1)
    rows = box_ref.shape[1]

    @pl.when(j == 0)
    def _init():
        o_ref[...] = jnp.zeros_like(o_ref)

    pr_cx = box_ref[0]
    pr_cy = box_ref[1]
    pr_w = box_ref[2]
    pr_h = box_ref[3]
    gt_cx = box_ref[4]
    gt_cy = box_ref[5]
    gt_w = box_ref[6]
    gt_h = box_ref[7]

    # Ground-truth corners.
    x_min_t = gt_cx - 0.5 * gt_w
    x_max_t = gt_cx + 0.5 * gt_w
    y_min_t = gt_cy - 0.5 * gt_h
    y_max_t = gt_cy + 0.5 * gt_h

    # Predicted corners, clamped to [0, 1] exactly like the torch code.
    x_min_p = jnp.maximum(pr_cx - 0.5 * pr_w, 0.0)
    x_max_p = jnp.minimum(pr_cx + 0.5 * pr_w, 1.0)
    y_min_p = jnp.maximum(pr_cy - 0.5 * pr_h, 0.0)
    y_max_p = jnp.minimum(pr_cy + 0.5 * pr_h, 1.0)

    ov0 = jnp.maximum(x_min_t, x_min_p)
    ov1 = jnp.maximum(y_min_t, y_min_p)
    ov2 = jnp.minimum(x_max_t, x_max_p)
    ov3 = jnp.minimum(y_max_t, y_max_p)

    incorrect = (ov2 < ov0) | (ov3 < ov1)           # (rows, 128) bool
    inc_f = jnp.where(incorrect, 1.0, 0.0)

    # Sum of squared coordinate errors, masked to incorrect boxes.
    d0 = pr_cx - gt_cx
    d1 = pr_cy - gt_cy
    d2 = pr_w - gt_w
    d3 = pr_h - gt_h
    sq = d0 * d0 + d1 * d1 + d2 * d2 + d3 * d3       # (rows, 128)

    # IoU masked to correct boxes (select before summing so degenerate lanes
    # never inject NaN).  Padded all-zero boxes land here with exactly 0 IoU.
    area_p = pr_w * pr_h
    area_g = gt_w * gt_h
    inter = (ov2 - ov0) * (ov3 - ov1)
    iou = jnp.where(incorrect, 0.0, inter / (area_p + area_g - inter + EPS))

    # Fold (rows, 128) -> (8, 128): layout-preserving reshape + axis-0 sum
    # (pure vreg adds on the VPU, no XLU cross-lane work per step).
    def fold(x):
        return jnp.sum(x.reshape(rows // 8, 8, 128), axis=0)

    partial = jnp.stack([fold(sq * inc_f), fold(inc_f), fold(iou)], axis=0)
    o_ref[...] = o_ref[...] + partial                # one unmasked (3,8,128) store


def _tiling(n):
    """Pick (rows, tiles_per_core) so each core streams (8, rows, 128) blocks."""
    rows_total = ((max(1, -(-n // 128)) + 7) // 8) * 8          # mult of 8
    rows = max(8, min(_MAX_ROWS,
                      ((-(-rows_total // _CORE_SPLITS) + 7) // 8) * 8))
    tiles_per_core = max(1, -(-rows_total // (rows * _CORE_SPLITS)))
    # Rebalance rows so the padded total hugs rows_total (minimal pad DMA).
    rows = max(8, ((-(-rows_total // (_CORE_SPLITS * tiles_per_core)) + 7) // 8) * 8)
    return rows, tiles_per_core


def _iou_dots_partials(boxes, rows, tiles_per_core):
    """boxes: (8, _CORE_SPLITS*tiles_per_core*rows, 128) f32 packed pr|gt coords."""
    return pl.pallas_call(
        _iou_dots_kernel,
        out_shape=jax.ShapeDtypeStruct((_CORE_SPLITS, 3, 8, 128), jnp.float32),
        grid_spec=pltpu.PrefetchScalarGridSpec(
            num_scalar_prefetch=0,
            grid=(_CORE_SPLITS, tiles_per_core),
            in_specs=[pl.BlockSpec(
                (8, rows, 128),
                lambda c, j: (0, c * tiles_per_core + j, 0))],
            out_specs=pl.BlockSpec(
                (None, 3, 8, 128),
                lambda c, j: (c, 0, 0, 0)),
        ),
        compiler_params=pltpu.CompilerParams(
            dimension_semantics=("parallel", "arbitrary"),
        ),
    )(boxes)


@jax.jit
def iou_dots_pallas(pr, gt):
    """pr, gt: (N, 4) boxes as (cx, cy, w, h). Returns scalar f32 metric."""
    pr = pr.astype(jnp.float32)
    gt = gt.astype(jnp.float32)
    n = pr.shape[0]

    rows, tiles_per_core = _tiling(n)
    n_pad = _CORE_SPLITS * tiles_per_core * rows * 128

    # Single fused repack into lane-dense (8, n_pad//128, 128).
    # TODO(synk): remove this extra HBM pass by producing (8, N) boxes upstream.
    boxes = jnp.concatenate([pr, gt], axis=1)                 # (N, 8)
    boxes = jnp.pad(boxes, ((0, n_pad - n), (0, 0)))          # (n_pad, 8)
    boxes = boxes.T.reshape(8, n_pad // 128, 128)             # (8, rows_total, 128)

    partials = _iou_dots_partials(boxes, rows, tiles_per_core)

    sums = jnp.sum(partials, axis=(0, 2, 3))   # (3,) = [sse, n_incorrect, iou_sum]
    sse, n_inc, iou_sum = sums[0], sums[1], sums[2]
    # Padded boxes always classify as "correct" with exactly 0 IoU / 0 SSE, so
    # n_correct over the real boxes is simply N - n_incorrect.
    n_corr = jnp.float32(n) - n_inc

    # Mirrors the torch control flow:
    #   if n_corr == 0: return -mse_over_incorrect
    #   if n_inc  == 0: mse_loss = 0
    #   return mean(iou_correct) + mse_loss
    # (Empty input, n_corr == n_inc == 0, returns 0.0 instead of torch NaN.)
    mse_loss = jnp.where(n_inc > 0.0, -sse / (4.0 * n_inc), 0.0)
    iou_mean = iou_sum / jnp.maximum(n_corr, 1.0)
    return jnp.where(n_corr == 0.0, mse_loss, iou_mean + mse_loss)


class IouDots:
    """JAX/Pallas port of the PyTorch IouDots module (device arg is irrelevant)."""

    def __init__(self, device=None):
        self.device = device

    def __call__(self, pr, gt):
        return iou_dots_pallas(pr, gt)


def _reference(pr, gt, eps=EPS):
    """Pure-jnp reference with the same semantics (masked sums instead of gather)."""
    pr = jnp.asarray(pr, jnp.float32)
    gt = jnp.asarray(gt, jnp.float32)
    x_min_t = gt[:, 0] - gt[:, 2] / 2
    x_max_t = gt[:, 0] + gt[:, 2] / 2
    y_min_t = gt[:, 1] - gt[:, 3] / 2
    y_max_t = gt[:, 1] + gt[:, 3] / 2
    x_min_p = jnp.maximum(pr[:, 0] - pr[:, 2] / 2, 0.0)
    x_max_p = jnp.minimum(pr[:, 0] + pr[:, 2] / 2, 1.0)
    y_min_p = jnp.maximum(pr[:, 1] - pr[:, 3] / 2, 0.0)
    y_max_p = jnp.minimum(pr[:, 1] + pr[:, 3] / 2, 1.0)
    ov0 = jnp.maximum(x_min_t, x_min_p)
    ov1 = jnp.maximum(y_min_t, y_min_p)
    ov2 = jnp.minimum(x_max_t, x_max_p)
    ov3 = jnp.minimum(y_max_t, y_max_p)
    inc = (ov2 < ov0) | (ov3 < ov1)
    n_inc = jnp.sum(inc.astype(jnp.float32))
    n_corr = jnp.sum((~inc).astype(jnp.float32))
    sse = jnp.sum(jnp.where(inc[:, None], (pr - gt) ** 2, 0.0))
    mse_loss = jnp.where(n_inc > 0.0, -sse / (4.0 * n_inc), 0.0)
    area_p = pr[:, 2] * pr[:, 3]
    area_g = gt[:, 2] * gt[:, 3]
    inter = (ov2 - ov0) * (ov3 - ov1)
    iou = jnp.where(~inc, inter / (area_p + area_g - inter + eps), 0.0)
    iou_mean = jnp.sum(iou) / jnp.maximum(n_corr, 1.0)
    return jnp.where(n_corr == 0.0, mse_loss, iou_mean + mse_loss)


if __name__ == "__main__":
    key = jax.random.PRNGKey(0)
    k1, k2, k3, k4 = jax.random.split(key, 4)
    N = 16
    # Box centers in [0,1], sizes in [0.05, 0.45]; some pred/gt pairs overlap,
    # some do not, exercising both branches of the metric.  N is far below the
    # tile capacity, so this also covers the partially-filled (padded) tile path.
    pr = jnp.concatenate(
        [jax.random.uniform(k1, (N, 2)),
         jax.random.uniform(k2, (N, 2)) * 0.4 + 0.05], axis=1)
    gt = jnp.concatenate(
        [jax.random.uniform(k3, (N, 2)),
         jax.random.uniform(k4, (N, 2)) * 0.4 + 0.05], axis=1)

    metric = IouDots(device=None)
    res = metric(pr, gt)
    jax.block_until_ready(res)
    ref = _reference(pr, gt)
    assert abs(float(res) - float(ref)) <= 1e-4, (float(res), float(ref))

    # All-disjoint case: exercises the n_correct == 0 branch (pure -MSE path).
    pr2 = jnp.concatenate([jnp.full((N, 2), 0.1), jnp.full((N, 2), 0.05)], axis=1)
    gt2 = jnp.concatenate([jnp.full((N, 2), 0.9), jnp.full((N, 2), 0.05)], axis=1)
    res2 = metric(pr2, gt2)
    jax.block_until_ready(res2)
    ref2 = _reference(pr2, gt2)
    assert abs(float(res2) - float(ref2)) <= 1e-4, (float(res2), float(ref2))

    print("KERNEL_OK")
</pallas_src>

<mosaic_0001>
module attributes {stable_mosaic.version = 11 : i64} {
  func.func @_iou_dots_kernel(%arg0: i32, %arg1: i32, %arg2: memref<8x8x128xf32, #tpu.memory_space<vmem>>, %arg3: memref<1x3x8x128xf32, #tpu.memory_space<vmem>>) attributes {dimension_semantics = [#tpu.dimension_semantics<parallel>, #tpu.dimension_semantics<arbitrary>], iteration_bounds = array<i64: 2, 1>, scalar_prefetch = 0 : i64, scratch_operands = 0 : i64, tpu.core_type = #tpu.core_type<tc>, window_params = [{transform_indices = @transform_0, window_bounds = array<i64: 8, 8, 128>}, {transform_indices = @transform_1, window_bounds = array<i64: 1, 3, 8, 128>}]} {
    %c0_i32 = arith.constant 0 : i32
    %0 = arith.cmpi eq, %arg1, %c0_i32 : i32
    %1 = arith.extui %0 : i1 to i32
    %c0_i32_0 = arith.constant 0 : i32
    %2 = arith.cmpi ne, %1, %c0_i32_0 : i32
    scf.if %2 {
      %cst_43 = arith.constant 0.000000e+00 : f32
      %101 = vector.broadcast %cst_43 : f32 to vector<3x8x128xf32>
      %c0_44 = arith.constant 0 : index
      %c0_45 = arith.constant 0 : index
      %c0_46 = arith.constant 0 : index
      %c0_47 = arith.constant 0 : index
      %102 = vector.load %arg3[%c0_44, %c0_45, %c0_46, %c0_47] : memref<1x3x8x128xf32, #tpu.memory_space<vmem>>, vector<1x3x8x128xf32>
      %103 = vector.shape_cast %102 : vector<1x3x8x128xf32> to vector<3x8x128xf32>
      %104 = vector.shape_cast %101 : vector<3x8x128xf32> to vector<1x3x8x128xf32>
      tpu.vector_store %arg3[%c0_44, %c0_45, %c0_46, %c0_47], %104 {strides = array<i32>} : memref<1x3x8x128xf32, #tpu.memory_space<vmem>>, vector<1x3x8x128xf32>,
    } else {
    }
    %c0 = arith.constant 0 : index
    %c0_1 = arith.constant 0 : index
    %c0_2 = arith.constant 0 : index
    %3 = vector.load %arg2[%c0, %c0_1, %c0_2] : memref<8x8x128xf32, #tpu.memory_space<vmem>>, vector<1x8x128xf32>
    %4 = vector.shape_cast %3 : vector<1x8x128xf32> to vector<8x128xf32>
    %c1 = arith.constant 1 : index
    %c0_3 = arith.constant 0 : index
    %c0_4 = arith.constant 0 : index
    %5 = vector.load %arg2[%c1, %c0_3, %c0_4] : memref<8x8x128xf32, #tpu.memory_space<vmem>>, vector<1x8x128xf32>
    %6 = vector.shape_cast %5 : vector<1x8x128xf32> to vector<8x128xf32>
    %c2 = arith.constant 2 : index
    %c0_5 = arith.constant 0 : index
    %c0_6 = arith.constant 0 : index
    %7 = vector.load %arg2[%c2, %c0_5, %c0_6] : memref<8x8x128xf32, #tpu.memory_space<vmem>>, vector<1x8x128xf32>
    %8 = vector.shape_cast %7 : vector<1x8x128xf32> to vector<8x128xf32>
    %c3 = arith.constant 3 : index
    %c0_7 = arith.constant 0 : index
    %c0_8 = arith.constant 0 : index
    %9 = vector.load %arg2[%c3, %c0_7, %c0_8] : memref<8x8x128xf32, #tpu.memory_space<vmem>>, vector<1x8x128xf32>
    %10 = vector.shape_cast %9 : vector<1x8x128xf32> to vector<8x128xf32>
    %c4 = arith.constant 4 : index
    %c0_9 = arith.constant 0 : index
    %c0_10 = arith.constant 0 : index
    %11 = vector.load %arg2[%c4, %c0_9, %c0_10] : memref<8x8x128xf32, #tpu.memory_space<vmem>>, vector<1x8x128xf32>
    %12 = vector.shape_cast %11 : vector<1x8x128xf32> to vector<8x128xf32>
    %c5 = arith.constant 5 : index
    %c0_11 = arith.constant 0 : index
    %c0_12 = arith.constant 0 : index
    %13 = vector.load %arg2[%c5, %c0_11, %c0_12] : memref<8x8x128xf32, #tpu.memory_space<vmem>>, vector<1x8x128xf32>
    %14 = vector.shape_cast %13 : vector<1x8x128xf32> to vector<8x128xf32>
    %c6 = arith.constant 6 : index
    %c0_13 = arith.constant 0 : index
    %c0_14 = arith.constant 0 : index
    %15 = vector.load %arg2[%c6, %c0_13, %c0_14] : memref<8x8x128xf32, #tpu.memory_space<vmem>>, vector<1x8x128xf32>
    %16 = vector.shape_cast %15 : vector<1x8x128xf32> to vector<8x128xf32>
    %c7 = arith.constant 7 : index
    %c0_15 = arith.constant 0 : index
    %c0_16 = arith.constant 0 : index
    %17 = vector.load %arg2[%c7, %c0_15, %c0_16] : memref<8x8x128xf32, #tpu.memory_space<vmem>>, vector<1x8x128xf32>
    %18 = vector.shape_cast %17 : vector<1x8x128xf32> to vector<8x128xf32>
    %cst = arith.constant 5.000000e-01 : f32
    %19 = vector.broadcast %cst : f32 to vector<8x128xf32>
    %20 = arith.mulf %19, %16 : vector<8x128xf32>
    %21 = arith.subf %12, %20 : vector<8x128xf32>
    %cst_17 = arith.constant 5.000000e-01 : f32
    %22 = vector.broadcast %cst_17 : f32 to vector<8x128xf32>
    %23 = arith.mulf %22, %16 : vector<8x128xf32>
    %24 = arith.addf %12, %23 : vector<8x128xf32>
    %cst_18 = arith.constant 5.000000e-01 : f32
    %25 = vector.broadcast %cst_18 : f32 to vector<8x128xf32>
    %26 = arith.mulf %25, %18 : vector<8x128xf32>
    %27 = arith.subf %14, %26 : vector<8x128xf32>
    %cst_19 = arith.constant 5.000000e-01 : f32
    %28 = vector.broadcast %cst_19 : f32 to vector<8x128xf32>
    %29 = arith.mulf %28, %18 : vector<8x128xf32>
    %30 = arith.addf %14, %29 : vector<8x128xf32>
    %cst_20 = arith.constant 5.000000e-01 : f32
    %31 = vector.broadcast %cst_20 : f32 to vector<8x128xf32>
    %32 = arith.mulf %31, %8 : vector<8x128xf32>
    %33 = arith.subf %4, %32 : vector<8x128xf32>
    %cst_21 = arith.constant 0.000000e+00 : f32
    %34 = vector.broadcast %cst_21 : f32 to vector<8x128xf32>
    %35 = arith.maximumf %33, %34 : vector<8x128xf32>
    %cst_22 = arith.constant 5.000000e-01 : f32
    %36 = vector.broadcast %cst_22 : f32 to vector<8x128xf32>
    %37 = arith.mulf %36, %8 : vector<8x128xf32>
    %38 = arith.addf %4, %37 : vector<8x128xf32>
    %cst_23 = arith.constant 1.000000e+00 : f32
    %39 = vector.broadcast %cst_23 : f32 to vector<8x128xf32>
    %40 = arith.minimumf %38, %39 : vector<8x128xf32>
    %cst_24 = arith.constant 5.000000e-01 : f32
    %41 = vector.broadcast %cst_24 : f32 to vector<8x128xf32>
    %42 = arith.mulf %41, %10 : vector<8x128xf32>
    %43 = arith.subf %6, %42 : vector<8x128xf32>
    %cst_25 = arith.constant 0.000000e+00 : f32
    %44 = vector.broadcast %cst_25 : f32 to vector<8x128xf32>
    %45 = arith.maximumf %43, %44 : vector<8x128xf32>
    %cst_26 = arith.constant 5.000000e-01 : f32
    %46 = vector.broadcast %cst_26 : f32 to vector<8x128xf32>
    %47 = arith.mulf %46, %10 : vector<8x128xf32>
    %48 = arith.addf %6, %47 : vector<8x128xf32>
    %cst_27 = arith.constant 1.000000e+00 : f32
    %49 = vector.broadcast %cst_27 : f32 to vector<8x128xf32>
    %50 = arith.minimumf %48, %49 : vector<8x128xf32>
    %51 = arith.maximumf %21, %35 : vector<8x128xf32>
    %52 = arith.maximumf %27, %45 : vector<8x128xf32>
    %53 = arith.minimumf %24, %40 : vector<8x128xf32>
    %54 = arith.minimumf %30, %50 : vector<8x128xf32>
    %55 = arith.cmpf olt, %53, %51 : vector<8x128xf32>
    %56 = arith.cmpf olt, %54, %52 : vector<8x128xf32>
    %57 = arith.ori %55, %56 : vector<8x128xi1>
    %cst_28 = arith.constant 1.000000e+00 : f32
    %cst_29 = arith.constant 0.000000e+00 : f32
    %58 = vector.broadcast %cst_28 : f32 to vector<8x128xf32>
    %59 = vector.broadcast %cst_29 : f32 to vector<8x128xf32>
    %60 = arith.select %57, %58, %59 : vector<8x128xi1>, vector<8x128xf32>
    %61 = arith.subf %4, %12 : vector<8x128xf32>
    %62 = arith.subf %6, %14 : vector<8x128xf32>
    %63 = arith.subf %8, %16 : vector<8x128xf32>
    %64 = arith.subf %10, %18 : vector<8x128xf32>
    %65 = arith.mulf %61, %61 : vector<8x128xf32>
    %66 = arith.mulf %62, %62 : vector<8x128xf32>
    %67 = arith.addf %65, %66 : vector<8x128xf32>
    %68 = arith.mulf %63, %63 : vector<8x128xf32>
    %69 = arith.addf %67, %68 : vector<8x128xf32>
    %70 = arith.mulf %64, %64 : vector<8x128xf32>
    %71 = arith.addf %69, %70 : vector<8x128xf32>
    %72 = arith.mulf %8, %10 : vector<8x128xf32>
    %73 = arith.mulf %16, %18 : vector<8x128xf32>
    %74 = arith.subf %53, %51 : vector<8x128xf32>
    %75 = arith.subf %54, %52 : vector<8x128xf32>
    %76 = arith.mulf %74, %75 : vector<8x128xf32>
    %77 = arith.addf %72, %73 : vector<8x128xf32>
    %78 = arith.subf %77, %76 : vector<8x128xf32>
    %cst_30 = arith.constant 1.000000e-07 : f32
    %79 = vector.broadcast %cst_30 : f32 to vector<8x128xf32>
    %80 = arith.addf %78, %79 : vector<8x128xf32>
    %81 = arith.divf %76, %80 : vector<8x128xf32>
    %cst_31 = arith.constant 0.000000e+00 : f32
    %82 = vector.broadcast %cst_31 : f32 to vector<8x128xf32>
    %83 = arith.select %57, %82, %81 : vector<8x128xi1>, vector<8x128xf32>
    %84 = arith.mulf %71, %60 : vector<8x128xf32>
    %85 = vector.shape_cast %84 : vector<8x128xf32> to vector<1x8x128xf32>
    %cst_32 = arith.constant dense<0.000000e+00> : vector<8x128xf32>
    %86 = vector.multi_reduction <add>, %85, %cst_32 [0] : vector<1x8x128xf32> to vector<8x128xf32>
    %87 = vector.shape_cast %60 : vector<8x128xf32> to vector<1x8x128xf32>
    %cst_33 = arith.constant dense<0.000000e+00> : vector<8x128xf32>
    %88 = vector.multi_reduction <add>, %87, %cst_33 [0] : vector<1x8x128xf32> to vector<8x128xf32>
    %89 = vector.shape_cast %83 : vector<8x128xf32> to vector<1x8x128xf32>
    %cst_34 = arith.constant dense<0.000000e+00> : vector<8x128xf32>
    %90 = vector.multi_reduction <add>, %89, %cst_34 [0] : vector<1x8x128xf32> to vector<8x128xf32>
    %91 = vector.shape_cast %86 : vector<8x128xf32> to vector<1x8x128xf32>
    %92 = vector.shape_cast %88 : vector<8x128xf32> to vector<1x8x128xf32>
    %93 = vector.shape_cast %90 : vector<8x128xf32> to vector<1x8x128xf32>
    %94 = tpu.concatenate %91, %92, %93 in 0 : vector<1x8x128xf32>, vector<1x8x128xf32>, vector<1x8x128xf32> -> vector<3x8x128xf32>
    %c0_35 = arith.constant 0 : index
    %c0_36 = arith.constant 0 : index
    %c0_37 = arith.constant 0 : index
    %c0_38 = arith.constant 0 : index
    %95 = vector.load %arg3[%c0_35, %c0_36, %c0_37, %c0_38] : memref<1x3x8x128xf32, #tpu.memory_space<vmem>>, vector<1x3x8x128xf32>
    %96 = vector.shape_cast %95 : vector<1x3x8x128xf32> to vector<3x8x128xf32>
    %97 = arith.addf %96, %94 : vector<3x8x128xf32>
    %c0_39 = arith.constant 0 : index
    %c0_40 = arith.constant 0 : index
    %c0_41 = arith.constant 0 : index
    %c0_42 = arith.constant 0 : index
    %98 = vector.load %arg3[%c0_39, %c0_40, %c0_41, %c0_42] : memref<1x3x8x128xf32, #tpu.memory_space<vmem>>, vector<1x3x8x128xf32>
    %99 = vector.shape_cast %98 : vector<1x3x8x128xf32> to vector<3x8x128xf32>
    %100 = vector.shape_cast %97 : vector<3x8x128xf32> to vector<1x3x8x128xf32>
    tpu.vector_store %arg3[%c0_39, %c0_40, %c0_41, %c0_42], %100 {strides = array<i32>} : memref<1x3x8x128xf32, #tpu.memory_space<vmem>>, vector<1x3x8x128xf32>,
    return
  }
  func.func @transform_0(%arg0: i32, %arg1: i32) -> (i32, i32, i32) {
    %c1_i32 = arith.constant 1 : i32
    %0 = arith.muli %arg0, %c1_i32 : i32
    %1 = arith.addi %0, %arg1 : i32
    %c0_i32 = arith.constant 0 : i32
    %c0_i32_0 = arith.constant 0 : i32
    %c0_i32_1 = arith.constant 0 : i32
    return %c0_i32, %1, %c0_i32_0 : i32, i32, i32
  }
  func.func @transform_1(%arg0: i32, %arg1: i32) -> (i32, i32, i32, i32) {
    %c0_i32 = arith.constant 0 : i32
    %c0_i32_0 = arith.constant 0 : i32
    %c0_i32_1 = arith.constant 0 : i32
    %c0_i32_2 = arith.constant 0 : i32
    return %arg0, %c0_i32, %c0_i32_0, %c0_i32_1 : i32, i32, i32, i32
  }
}

</mosaic_0001>

<llo_original>
// kernel: iou_dots_pallas.1
$region0: #{iou_dots_pallas.1}
  #allocation0 [shape = 'u32[]', space=smem, size = 0x4, offset = 0x4, fixed_abs, tag = 'smem constant byte address 0x4 - core index']
  #allocation1 [shape = 'u32[144,128]{1,0:T(1,128)}', space=vmem, size = 0x12000, scoped, tag = 'internal scratch']
  %s0 = inlined_call_operand.vmem [shape: f32[8,16,128], index: 0, kind: input, shape index: {}]
  %s1 = inlined_call_operand.vmem [shape: f32[2,3,8,128], index: 1, kind: output, shape index: {}]
  %s2 = sld [smem:[#allocation0]]
  $region79: #{iou_dots_pallas.1} parent=0
    _
  %s4 = ssub.s32 1, %s2
  %s5 = scalar_select 0, %s4, %s2
  $region1: #{iou_dots_pallas.1} parent=0
    #allocation2 [shape = 'u8[65536]{0}', space=vmem, size = 0x10000, scoped, tag = 'input window, operand 0']
    loop: start=0, step=1, limit=4
    $region2: #{iou_dots_pallas.1} parent=1 // loop_pre_header
      _
    $region3: #{iou_dots_pallas.1} parent=1 // loop_header
      %s7 = sphi 0, %s11
      %p8 = scmp.ge.s32.totalorder %s7, 4
      %s14 = sphi 0, %s26
      %s15 = sphi 0, %s22
      %s16 = sphi 0, %s14
      %s17 = sphi 0, %s15
      %s18 = sphi 0, %s16
      %s19 = sphi 0, %s17
      %s31 = sphi 0, %s33
      %s34 = sphi 0, %s31
      %s35 = sphi 0, %s34
      %s51 = sphi 0, %s35
      %s57 = sphi 0, %s59
      %s60 = sphi 0, %s57
      %s61 = sphi 0, %s60
      %s77 = sphi 0, %s61
    $region4: #{iou_dots_pallas.1} parent=1 // loop_header_branch
      %10 = sbr.rel (%p8) target = $region8
    $region5: #{iou_dots_pallas.1} parent=1 // loop_body
      %s12 = ssub.s32 %s7, 1
      %s13 = ssub.s32 %s7, 2
      %s20 = sadd.s32 1, %s15
      %p21 = scmp.ge.s32.totalorder %s20, 1
      %s22 = scalar_select %p21, 0, %s20
      %s23 = sadd.s32 1, %s14
      %s24 = scalar_select %p21, %s23, %s14
      %p25 = scmp.ge.s32.totalorder %s24, 2
      %s26 = scalar_select %p25, 0, %s24
      %s27 = sadd.s32 %s14, %s15
      %s28 = sadd.s32 %s26, %s22
      %s29 = ssub.s32 %s27, %s28
      %p30 = scmp.eq.s32.totalorder %s29, 0
      %s32 = sadd.s32 %s31, 1
      %s33 = scalar_select %p30, %s31, %s32
      %p36 = pneg %p30
      %p37 = scmp.eq.s32.totalorder %s7, 1
      %p38 = por %p36, %p37
      %p39 = scmp.ne.s32.totalorder %s31, %s34
      %p40 = scmp.eq.s32.totalorder %s7, 0
      %p41 = por %p39, %p40
      %p42 = scmp.ne.s32.totalorder %s31, %s34
      %p43 = scmp.eq.s32.totalorder %s12, 1
      %p44 = por %p42, %p43
      %p45 = scmp.ne.s32.totalorder %s34, %s35
      %p46 = scmp.eq.s32.totalorder %s12, 0
      %p47 = por %p45, %p46
      %p48 = scmp.ne.s32.totalorder %s34, %s35
      %p49 = scmp.eq.s32.totalorder %s13, 1
      %p50 = por %p48, %p49
      %p52 = scmp.ne.s32.totalorder %s35, %s51
      %p53 = scmp.eq.s32.totalorder %s13, 0
      %p54 = por %p52, %p53
      %s55 = ssub.s32 %s14, %s26
      %p56 = scmp.eq.s32.totalorder %s55, 0
      %s58 = sadd.s32 %s57, 1
      %s59 = scalar_select %p56, %s57, %s58
      %p62 = pneg %p56
      %p63 = scmp.eq.s32.totalorder %s7, 1
      %p64 = por %p62, %p63
      %p65 = scmp.ne.s32.totalorder %s57, %s60
      %p66 = scmp.eq.s32.totalorder %s7, 0
      %p67 = por %p65, %p66
      %p68 = scmp.ne.s32.totalorder %s57, %s60
      %p69 = scmp.eq.s32.totalorder %s12, 1
      %p70 = por %p68, %p69
      %p71 = scmp.ne.s32.totalorder %s60, %s61
      %p72 = scmp.eq.s32.totalorder %s12, 0
      %p73 = por %p71, %p72
      %p74 = scmp.ne.s32.totalorder %s60, %s61
      %p75 = scmp.eq.s32.totalorder %s13, 1
      %p76 = por %p74, %p75
      %p78 = scmp.ne.s32.totalorder %s61, %s77
      %p79 = scmp.eq.s32.totalorder %s13, 0
      %p80 = por %p78, %p79
      %p81 = scmp.le.s32.totalorder 1, %s7
      %p82 = scmp.lt.s32.totalorder %s7, 3
      %p83 = pnand %p81, %p82
      %p84 = pneg %p83
      // Predicated region
      $region9: #{iou_dots_pallas.1} parent=5 // pred_check
        _
      $region10: #{iou_dots_pallas.1} parent=5 // pred_check_branch
        %86 = sbr.rel (%p83) target = $region12
      $region11: #{iou_dots_pallas.1} parent=5 // pred_region
        %s87 = ssub.s32 %s7, 1
      $region12: #{iou_dots_pallas.1} parent=5 // pred_fallthru
        _
      %p88 = scmp.lt.s32.totalorder %s7, 2
      // Predicated region
      $region13: #{iou_dots_pallas.1} parent=5 // pred_check
        %p89 = pneg %p88
      $region14: #{iou_dots_pallas.1} parent=5 // pred_check_branch
        %91 = sbr.rel (%p89) target = $region16
      $region15: #{iou_dots_pallas.1} parent=5 // pred_region
        // Predicated region
        $region17: #{iou_dots_pallas.1} parent=15 // pred_check
          %p92 = pneg %p41
        $region18: #{iou_dots_pallas.1} parent=15 // pred_check_branch
          %94 = sbr.rel (%p92) target = $region20
        $region19: #{iou_dots_pallas.1} parent=15 // pred_region
          %s95 = sand.u32 %s31, 1
          %s96 = sand.u32 %s31, 1
          %s97 = smul.addr %s96, 64
          %s98 = scalar_lea.vmem [#allocation2], %s97
          %s99 = sadd.s32 %s14, %s15
          %s100 = smul.addr %s99, 8
          %s101 = scalar_lea.vmem %s0, %s100
          // Predicated region
          $region21: #{iou_dots_pallas.1} parent=19 // pred_check
            _
          $region22: #{iou_dots_pallas.1} parent=19 // pred_check_branch
            %103 = sbr.rel (0) target = $region24
          $region23: #{iou_dots_pallas.1} parent=19 // pred_region
            // Predicated region
            $region25: #{iou_dots_pallas.1} parent=23 // pred_check
              _
            $region26: #{iou_dots_pallas.1} parent=23 // pred_check_branch
              %105 = sbr.rel (0) target = $region28
            $region27: #{iou_dots_pallas.1} parent=23 // pred_region
              // Predicated region
              $region40: #{iou_dots_pallas.1} parent=27 // pred_check
                _
              $region41: #{iou_dots_pallas.1} parent=27 // pred_check_branch
                %134 = sbr.rel (0) target = $region43
              $region42: #{iou_dots_pallas.1} parent=27 // pred_region
                loop: start=0, step=1, limit=1
                $region44: #{iou_dots_pallas.1} parent=42 // loop_pre_header
                  _
                $region45: #{iou_dots_pallas.1} parent=42 // loop_header
                  %s136 = sphi 0, %s140
                  %p137 = scmp.ge.s32.totalorder %s136, 1
                  %s141 = sphi %s101, %s101
                  %s142 = sphi %s98, %s98
                $region46: #{iou_dots_pallas.1} parent=42 // loop_header_branch
                  %139 = sbr.rel (%p137) target = $region50
                $region47: #{iou_dots_pallas.1} parent=42 // loop_body
                  %v143 = vld [vmem:[%s141] sm:$0xff]
                  %144 = vst [vmem:[%s142] sm:$0xff] %v143
                  %v145 = vld [vmem:[%s141 + $0x10] sm:$0xff]
                  %146 = vst [vmem:[%s142 + $0x8] sm:$0xff] %v145
                  %v147 = vld [vmem:[%s141 + $0x20] sm:$0xff]
                  %148 = vst [vmem:[%s142 + $0x10] sm:$0xff] %v147
                  %v149 = vld [vmem:[%s141 + $0x30] sm:$0xff]
                  %150 = vst [vmem:[%s142 + $0x18] sm:$0xff] %v149
                  %v151 = vld [vmem:[%s141 + $0x40] sm:$0xff]
                  %152 = vst [vmem:[%s142 + $0x20] sm:$0xff] %v151
                  %v153 = vld [vmem:[%s141 + $0x50] sm:$0xff]
                  %154 = vst [vmem:[%s142 + $0x28] sm:$0xff] %v153
                  %v155 = vld [vmem:[%s141 + $0x60] sm:$0xff]
                  %156 = vst [vmem:[%s142 + $0x30] sm:$0xff] %v155
                  %v157 = vld [vmem:[%s141 + $0x70] sm:$0xff]
                  %158 = vst [vmem:[%s142 + $0x38] sm:$0xff] %v157
                $region48: #{iou_dots_pallas.1} parent=42 // loop_footer
                  %s140 = sadd.s32 1, %s136
                $region49: #{iou_dots_pallas.1} parent=42 // loop_footer_branch
                  %135 = sbr.rel target = $region45
                $region50: #{iou_dots_pallas.1} parent=42 // loop_exit
                  _
              $region43: #{iou_dots_pallas.1} parent=27 // pred_fallthru
                _
              // Predicated region
              $region51: #{iou_dots_pallas.1} parent=27 // pred_check
                _
              $region52: #{iou_dots_pallas.1} parent=27 // pred_check_branch
                %160 = sbr.rel target = $region54
              $region53: #{iou_dots_pallas.1} parent=27 // pred_region
                _
              $region54: #{iou_dots_pallas.1} parent=27 // pred_fallthru
                _
            $region28: #{iou_dots_pallas.1} parent=23 // pred_fallthru
              _
            // Predicated region
            $region29: #{iou_dots_pallas.1} parent=23 // pred_check
              _
            $region30: #{iou_dots_pallas.1} parent=23 // pred_check_branch
              %107 = sbr.rel target = $region32
            $region31: #{iou_dots_pallas.1} parent=23 // pred_region
              loop: start=0, step=1, limit=1
              $region33: #{iou_dots_pallas.1} parent=31 // loop_pre_header
                _
              $region34: #{iou_dots_pallas.1} parent=31 // loop_header
                %s110 = sphi 0, %s114
                %p111 = scmp.ge.s32.totalorder %s110, 1
                %s115 = sphi %s101, %s101
                %s116 = sphi %s98, %s98
              $region35: #{iou_dots_pallas.1} parent=31 // loop_header_branch
                %113 = sbr.rel (%p111) target = $region39
              $region36: #{iou_dots_pallas.1} parent=31 // loop_body
                %v117 = vld [vmem:[%s115] sm:$0xff]
                %118 = vst [vmem:[%s116] sm:$0xff] %v117
                %v119 = vld [vmem:[%s115 + $0x10] sm:$0xff]
                %120 = vst [vmem:[%s116 + $0x8] sm:$0xff] %v119
                %v121 = vld [vmem:[%s115 + $0x20] sm:$0xff]
                %122 = vst [vmem:[%s116 + $0x10] sm:$0xff] %v121
                %v123 = vld [vmem:[%s115 + $0x30] sm:$0xff]
                %124 = vst [vmem:[%s116 + $0x18] sm:$0xff] %v123
                %v125 = vld [vmem:[%s115 + $0x40] sm:$0xff]
                %126 = vst [vmem:[%s116 + $0x20] sm:$0xff] %v125
                %v127 = vld [vmem:[%s115 + $0x50] sm:$0xff]
                %128 = vst [vmem:[%s116 + $0x28] sm:$0xff] %v127
                %v129 = vld [vmem:[%s115 + $0x60] sm:$0xff]
                %130 = vst [vmem:[%s116 + $0x30] sm:$0xff] %v129
                %v131 = vld [vmem:[%s115 + $0x70] sm:$0xff]
                %132 = vst [vmem:[%s116 + $0x38] sm:$0xff] %v131
              $region37: #{iou_dots_pallas.1} parent=31 // loop_footer
                %s114 = sadd.s32 1, %s110
              $region38: #{iou_dots_pallas.1} parent=31 // loop_footer_branch
                %109 = sbr.rel target = $region34
              $region39: #{iou_dots_pallas.1} parent=31 // loop_exit
                _
            $region32: #{iou_dots_pallas.1} parent=23 // pred_fallthru
              _
          $region24: #{iou_dots_pallas.1} parent=19 // pred_fallthru
            _
          %161 = vnop
        $region20: #{iou_dots_pallas.1} parent=15 // pred_fallthru
          _
      $region16: #{iou_dots_pallas.1} parent=5 // pred_fallthru
        _
      %p162 = scmp.le.s32.totalorder 1, %s7
      %p163 = scmp.lt.s32.totalorder %s7, 3
      %p164 = pnand %p162, %p163
      %p165 = pneg %p164
      // Predicated region
      $region55: #{iou_dots_pallas.1} parent=5 // pred_check
        _
      $region56: #{iou_dots_pallas.1} parent=5 // pred_check_branch
        %167 = sbr.rel (%p164) target = $region58
      $region57: #{iou_dots_pallas.1} parent=5 // pred_region
        %s168 = ssub.s32 %s7, 1
        %s169 = sand.u32 %s34, 1
        %s170 = sand.u32 %s34, 1
        %s171 = smul.addr %s170, 64
        %s172 = scalar_lea.vmem [#allocation2], %s171
        // Predicated region
        $region59: #{iou_dots_pallas.1} parent=57 // pred_check
          %p173 = pneg %p47
        $region60: #{iou_dots_pallas.1} parent=57 // pred_check_branch
          %175 = sbr.rel (%p173) target = $region62
        $region61: #{iou_dots_pallas.1} parent=57 // pred_region
          _
        $region62: #{iou_dots_pallas.1} parent=57 // pred_fallthru
          _
        %s176 = sand.u32 %s34, 1
        %s177 = sand.u32 %s34, 1
        %s178 = smul.addr %s177, 64
        %s179 = scalar_lea.vmem [#allocation2], %s178
        %p180 = pneg %p47
        %p181 = pneg %p44
        %p182 = pneg %p73
        %p183 = pneg %p70
        %p184 = scmp.lt.s32.totalorder %s16, 1
        %s185 = scalar_select %p184, %s16, 1
        %s186 = smul.addr %s185, 3
        %s187 = smul.addr %s186, 8
        %s188 = scalar_lea.vmem %s1, %s187
        %s189 = sadd.s32 %s16, %s17
        %p190 = scmp.lt.s32.totalorder %s16, 1
        %s191 = scalar_select %p190, %s16, 1
        %s192 = smul.addr %s191, 3
        %s193 = smul.addr %s192, 8
        %s194 = scalar_lea.vmem %s1, %s193
        %p195 = scmp.eq.s32.totalorder %s17, 0
        // Predicated region
        $region63: #{iou_dots_pallas.1} parent=57 // pred_check
          %p196 = pneg %p195
        $region64: #{iou_dots_pallas.1} parent=57 // pred_check_branch
          %198 = sbr.rel (%p196) target = $region66
        $region65: #{iou_dots_pallas.1} parent=57 // pred_region
          %199 = vst [vmem:[%s194] sm:$0xff] 0.0
          %200 = vst [vmem:[%s194 + $0x8] sm:$0xff] 0.0
          %201 = vst [vmem:[%s194 + $0x10] sm:$0xff] 0.0
        $region66: #{iou_dots_pallas.1} parent=57 // pred_fallthru
          _
        %v202 = vld [vmem:[%s172] sm:$0xff]
        %s203 = scalar_lea.vmem %s172, 8 [#allocation2]
        %v204 = vld [vmem:[%s203] sm:$0xff]
        %s205 = scalar_lea.vmem %s172, 16 [#allocation2]
        %v206 = vld [vmem:[%s205] sm:$0xff]
        %s207 = scalar_lea.vmem %s172, 24 [#allocation2]
        %v208 = vld [vmem:[%s207] sm:$0xff]
        %s209 = scalar_lea.vmem %s172, 32 [#allocation2]
        %v210 = vld [vmem:[%s209] sm:$0xff]
        %s211 = scalar_lea.vmem %s172, 40 [#allocation2]
        %v212 = vld [vmem:[%s211] sm:$0xff]
        %s213 = scalar_lea.vmem %s172, 48 [#allocation2]
        %v214 = vld [vmem:[%s213] sm:$0xff]
        %s215 = scalar_lea.vmem %s172, 56 [#allocation2]
        %v216 = vld [vmem:[%s215] sm:$0xff]
        %v217 = vmul.f32 %v214, 0.5
        %v218 = vsub.f32 %v210, %v217
        %v219 = vadd.f32 %v210, %v217
        %v220 = vmul.f32 %v216, 0.5
        %v221 = vsub.f32 %v212, %v220
        %v222 = vadd.f32 %v212, %v220
        %v223 = vmul.f32 %v206, 0.5
        %v224 = vsub.f32 %v202, %v223
        %v225 = vmax.f32 %v224, 0.0
        %v226 = vadd.f32 %v202, %v223
        %v227 = vmin.f32 %v226, 1.0
        %v228 = vmul.f32 %v208, 0.5
        %v229 = vsub.f32 %v204, %v228
        %v230 = vmax.f32 %v229, 0.0
        %v231 = vadd.f32 %v204, %v228
        %v232 = vmin.f32 %v231, 1.0
        %v233 = vmax.f32 %v218, %v225
        %v234 = vmax.f32 %v221, %v230
        %v235 = vmin.f32 %v219, %v227
        %v236 = vmin.f32 %v222, %v232
        %vm237 = vcmp.lt.f32.partialorder %v235, %v233
        %vm238 = vcmp.lt.f32.partialorder %v236, %v234
        %vm239 = vmor %vm237, %vm238
        %v240 = vsel %vm239, 1.0, 0.0
        %v241 = vsub.f32 %v202, %v210
        %v242 = vsub.f32 %v204, %v212
        %v243 = vsub.f32 %v206, %v214
        %v244 = vsub.f32 %v208, %v216
        %v245 = vmul.f32 %v241, %v241
        %v246 = vmul.f32 %v242, %v242
        %v247 = vadd.f32 %v245, %v246
        %v248 = vmul.f32 %v243, %v243
        %v249 = vadd.f32 %v247, %v248
        %v250 = vmul.f32 %v244, %v244
        %v251 = vadd.f32 %v249, %v250
        %v252 = vmul.f32 %v206, %v208
        %v253 = vmul.f32 %v214, %v216
        %v254 = vsub.f32 %v235, %v233
        %v255 = vsub.f32 %v236, %v234
        %v256 = vmul.f32 %v254, %v255
        %v257 = vadd.f32 %v252, %v253
        %v258 = vsub.f32 %v257, %v256
        %v259 = vadd.f32 %v258, 1e-07
        %v260 = vrcp.pop %v259
        %v261 = vmul.f32 %v256, %v260
        %v262 = vsel %vm239, 0.0, %v261
        %v263 = vmul.f32 %v251, %v240
        %v264 = vadd.f32 %v263, 0.0
        %v265 = vadd.f32 %v240, 0.0
        %v266 = vadd.f32 %v262, 0.0
        %v267 = vld [vmem:[%s194] sm:$0xff]
        %v268 = vld [vmem:[%s194 + $0x8] sm:$0xff]
        %v269 = vld [vmem:[%s194 + $0x10] sm:$0xff]
        %v270 = vadd.f32 %v267, %v264
        %v271 = vadd.f32 %v268, %v265
        %v272 = vadd.f32 %v269, %v266
        %273 = vst [vmem:[%s194] sm:$0xff] %v270
        %274 = vst [vmem:[%s194 + $0x8] sm:$0xff] %v271
        %275 = vst [vmem:[%s194 + $0x10] sm:$0xff] %v272
        %p276 = scmp.lt.s32.totalorder %s16, 1
        %s277 = scalar_select %p276, %s16, 1
        %s278 = smul.addr %s277, 3
        %s279 = smul.addr %s278, 8
        %s280 = scalar_lea.vmem %s1, %s279
        // Predicated region
        $region67: #{iou_dots_pallas.1} parent=57 // pred_check
          %p281 = pneg %p70
        $region68: #{iou_dots_pallas.1} parent=57 // pred_check_branch
          %283 = sbr.rel (%p281) target = $region70
        $region69: #{iou_dots_pallas.1} parent=57 // pred_region
          _
        $region70: #{iou_dots_pallas.1} parent=57 // pred_fallthru
          _
      $region58: #{iou_dots_pallas.1} parent=5 // pred_fallthru
        _
      %p284 = scmp.le.s32.totalorder 2, %s7
      // Predicated region
      $region71: #{iou_dots_pallas.1} parent=5 // pred_check
        %p285 = pneg %p284
      $region72: #{iou_dots_pallas.1} parent=5 // pred_check_branch
        %287 = sbr.rel (%p285) target = $region74
      $region73: #{iou_dots_pallas.1} parent=5 // pred_region
        %s288 = ssub.s32 %s7, 2
        // Predicated region
        $region75: #{iou_dots_pallas.1} parent=73 // pred_check
          %p289 = pneg %p76
        $region76: #{iou_dots_pallas.1} parent=73 // pred_check_branch
          %291 = sbr.rel (%p289) target = $region78
        $region77: #{iou_dots_pallas.1} parent=73 // pred_region
          %p292 = scmp.lt.s32.totalorder %s18, 1
          %s293 = scalar_select %p292, %s18, 1
          %s294 = smul.addr %s293, 3
          %s295 = smul.addr %s294, 8
          %s296 = scalar_lea.vmem %s1, %s295
        $region78: #{iou_dots_pallas.1} parent=73 // pred_fallthru
          _
      $region74: #{iou_dots_pallas.1} parent=5 // pred_fallthru
        _
    $region6: #{iou_dots_pallas.1} parent=1 // loop_footer
      %s11 = sadd.s32 1, %s7
    $region7: #{iou_dots_pallas.1} parent=1 // loop_footer_branch
      %6 = sbr.rel target = $region3
    $region8: #{iou_dots_pallas.1} parent=1 // loop_exit
      _

</llo_original>
